<compile_context>
chip_gen: v5e
topology: v5e:2x2
jax: 0.10.0
libtpu: 0.0.40
codegen_flags: <defaults>
</compile_context>

<pallas_src>
import functools

import jax
import jax.numpy as jnp
from jax.experimental import pallas as pl
from jax.experimental.pallas import tpu as pltpu

_LANE = 128


def get_quantized_range(bitwidth):
    quantized_max = (1 << (bitwidth - 1)) - 1
    quantized_min = -(1 << (bitwidth - 1))
    return quantized_min, quantized_max


def _round_up(x, m):
    return -(-x // m) * m


def _vmem_capacity_bytes():
    try:
        cap = int(pltpu.get_tpu_info().vmem_capacity_bytes)
        if cap > 0:
            return cap
    except Exception:
        pass
    return 64 * 1024 * 1024  # conservative (v7x per-TensorCore VMEM)


def _use_int8_mxu():
    """Native int8 x int8 -> int32 MXU path only on v5/v6 (v7x has no int MXU)."""
    try:
        kind = jax.devices()[0].device_kind.lower()
    except Exception:
        return False
    return ("v5" in kind) or ("v6" in kind)


# --------------------------------------------------------------------------- #
# Kernels
# --------------------------------------------------------------------------- #
def _epilogue(acc, bias_ref, o_ref, *, inv_scale, qmin, qmax):
    if acc.dtype == jnp.float32:
        # torch: output.round().to(int32) -- bf16 path accumulates exact
        # integers in f32 for these shapes; int path is already exact.
        acc = jnp.round(acc)
    acc = acc + bias_ref[...]                       # bias * 2^(in+w-b) pre-folded
    scaled = acc.astype(jnp.float32) * inv_scale    # * 2^-(in+w-out)
    # float -> int8 truncates toward zero, matching torch .to(torch.int8).
    o_ref[...] = jnp.clip(scaled, qmin, qmax).astype(jnp.int8)


def _qconv_kernel_single_k(p_ref, w_ref, b_ref, o_ref, *, acc_dtype,
                           inv_scale, qmin, qmax):
    # Single K step: no accumulator round-trip through VMEM.
    acc = jnp.dot(p_ref[...], w_ref[...], preferred_element_type=acc_dtype)
    _epilogue(acc, b_ref, o_ref, inv_scale=inv_scale, qmin=qmin, qmax=qmax)


def _qconv_kernel_multi_k(p_ref, w_ref, b_ref, o_ref, acc_ref, *,
                          inv_scale, qmin, qmax):
    k = pl.program_id(2)
    prod = jnp.dot(p_ref[...], w_ref[...], preferred_element_type=acc_ref.dtype)

    @pl.when(k == 0)
    def _():
        acc_ref[...] = prod          # direct write: no zero-init pass

    @pl.when(k != 0)
    def _():
        acc_ref[...] += prod

    @pl.when(k == pl.num_programs(2) - 1)
    def _():
        _epilogue(acc_ref[...], b_ref, o_ref,
                  inv_scale=inv_scale, qmin=qmin, qmax=qmax)


# --------------------------------------------------------------------------- #
# Tiling plan
# --------------------------------------------------------------------------- #
def _plan_tiles(M, K, Cout, op_bytes, budget):
    Cp = _round_up(Cout, _LANE)
    Kp = _round_up(K, _LANE)

    # keep >= 2 grid steps on the parallel M axis when M allows it (v7x: 2 TCs)
    tm_cap = max(_LANE, _round_up(-(-M // 2), _LANE))

    def fits(tm, tk, tn):
        patches = 2 * tm * tk * op_bytes      # double-buffered input stream
        weight = 2 * tk * tn * op_bytes       # conservatively double-buffered
        bias = 2 * tn * 4
        out = 2 * tm * tn                     # int8 output, double-buffered
        acc = tm * tn * 4                     # accumulator scratch headroom
        return patches + weight + bias + out + acc <= budget

    # 1) resident-weight configs: single K / N step -> weight DMA'd once,
    #    patches streamed exactly once (HBM-traffic minimum).
    for tm in (1024, 512, 256, 128):
        tm_eff = min(tm, tm_cap)
        if fits(tm_eff, Kp, Cp):
            return tm_eff, Kp, Cp

    # 2) fallback: tile N and K; K axis last ("arbitrary") with VMEM accumulator.
    tn = min(Cp, 4 * _LANE)
    tk = min(Kp, 4 * _LANE)
    for tm in (512, 256, 128):
        tm_eff = min(tm, tm_cap)
        if fits(tm_eff, tk, tn):
            return tm_eff, tk, tn
    return _LANE, tk, tn


# --------------------------------------------------------------------------- #
# Wrapper
# --------------------------------------------------------------------------- #
def qconv2d(x, weight, bias, *, weight_n_frac, bias_n_frac, input_n_frac,
            output_n_frac, stride, padding, dilation, groups,
            feature_bitwidth=8, weight_bitwidth=8, tile_override=None):
    """Forward pass of QConv2d. x: (N, C, H, W); weight: (Cout, Cin, kH, kW)."""
    assert groups == 1  # TODO(synk): grouped conv (groups > 1) not implemented.
    # Replicate the module's constructor swap: F.conv2d gets (padding[1], padding[0]).
    pad_h, pad_w = padding[1], padding[0]
    sh, sw = stride
    dh, dw = dilation

    N, Cin, H, W = x.shape
    Cout, Cin_w, kh, kw = weight.shape
    assert Cin == Cin_w

    use_int8 = (_use_int8_mxu()
                and feature_bitwidth <= 8 and weight_bitwidth <= 8)
    op_dtype = jnp.int8 if use_int8 else jnp.bfloat16
    acc_dtype = jnp.int32 if use_int8 else jnp.float32
    op_bytes = jnp.dtype(op_dtype).itemsize

    def to_op(a):
        if use_int8 and jnp.issubdtype(a.dtype, jnp.floating):
            a = jnp.round(a)
        return a.astype(op_dtype)

    # ---- im2col, channels-last (no transpose of the kh*kw-inflated buffer) --
    x_nhwc = jnp.transpose(to_op(x), (0, 2, 3, 1))
    xp = jnp.pad(x_nhwc, ((0, 0), (pad_h, pad_h), (pad_w, pad_w), (0, 0)))
    Hp, Wp = H + 2 * pad_h, W + 2 * pad_w
    oh = (Hp - (dh * (kh - 1) + 1)) // sh + 1
    ow = (Wp - (dw * (kw - 1) + 1)) // sw + 1

    cols = []
    for i in range(kh):
        for j in range(kw):
            cols.append(xp[:, i * dh: i * dh + sh * (oh - 1) + 1: sh,
                           j * dw: j * dw + sw * (ow - 1) + 1: sw, :])
    patches = jnp.stack(cols, axis=3)            # (N, oh, ow, kh*kw, Cin)
    patches = patches.reshape(N * oh * ow, kh * kw * Cin)

    # weight flattened to the same (i, j, c) K ordering as the patches
    w2d = jnp.transpose(to_op(weight), (2, 3, 1, 0)).reshape(kh * kw * Cin, Cout)

    M, K = patches.shape

    # ---- generation-aware VMEM budget & tiling ------------------------------
    vmem_cap = _vmem_capacity_bytes()
    vmem_limit = int(min(96 * 1024 * 1024, vmem_cap * 3 // 4))
    budget = vmem_limit * 4 // 5

    if tile_override is not None:
        tile_m, tile_k, tile_n = tile_override
    else:
        tile_m, tile_k, tile_n = _plan_tiles(M, K, Cout, op_bytes, budget)

    Mp = _round_up(M, tile_m)
    Kp = _round_up(K, tile_k)
    Cp = _round_up(Cout, tile_n)

    patches = jnp.pad(patches, ((0, Mp - M), (0, Kp - K)))
    w2d = jnp.pad(w2d, ((0, Kp - K), (0, Cp - Cout)))

    if bias is None:
        bias = jnp.zeros((Cout,), jnp.int32)
    bias_mul = 1 << (input_n_frac + weight_n_frac - bias_n_frac)
    if use_int8:
        bias_row = (bias.astype(jnp.int32) * bias_mul).reshape(1, Cout)
    else:
        bias_row = (bias.astype(jnp.float32) * float(bias_mul)).reshape(1, Cout)
    bias_row = jnp.pad(bias_row, ((0, 0), (0, Cp - Cout)))

    inv_scale = 1.0 / (1 << (input_n_frac + weight_n_frac - output_n_frac))
    qmin, qmax = get_quantized_range(feature_bitwidth)

    n_k = Kp // tile_k
    grid = (Mp // tile_m, Cp // tile_n, n_k)

    in_specs = [
        pl.BlockSpec((tile_m, tile_k), lambda i, j, k: (i, k)),   # patches
        pl.BlockSpec((tile_k, tile_n), lambda i, j, k: (k, j)),   # weight
        pl.BlockSpec((1, tile_n), lambda i, j, k: (0, j)),        # bias row
    ]
    out_spec = pl.BlockSpec((tile_m, tile_n), lambda i, j, k: (i, j))
    cparams = pltpu.CompilerParams(
        dimension_semantics=("parallel", "parallel", "arbitrary"),
        vmem_limit_bytes=vmem_limit)

    if n_k == 1:
        kernel = functools.partial(_qconv_kernel_single_k, acc_dtype=acc_dtype,
                                   inv_scale=inv_scale,
                                   qmin=float(qmin), qmax=float(qmax))
        scratch = ()
    else:
        kernel = functools.partial(_qconv_kernel_multi_k,
                                   inv_scale=inv_scale,
                                   qmin=float(qmin), qmax=float(qmax))
        scratch = (pltpu.VMEM((tile_m, tile_n), acc_dtype),)

    out2d = pl.pallas_call(
        kernel,
        out_shape=jax.ShapeDtypeStruct((Mp, Cp), jnp.int8),
        grid=grid,
        in_specs=in_specs,
        out_specs=out_spec,
        scratch_shapes=scratch,
        compiler_params=cparams,
    )(patches, w2d, bias_row)

    out2d = out2d[:M, :Cout]
    return out2d.reshape(N, oh, ow, Cout).transpose(0, 3, 1, 2)   # NCHW int8


# --------------------------------------------------------------------------- #
# Pure-JAX reference (replicates the torch forward exactly)
# --------------------------------------------------------------------------- #
def _reference(x, weight, bias, *, weight_n_frac, bias_n_frac, input_n_frac,
               output_n_frac, stride, padding, dilation, feature_bitwidth=8):
    pad_h, pad_w = padding[1], padding[0]
    out = jax.lax.conv_general_dilated(
        x.astype(jnp.float32), weight.astype(jnp.float32),
        window_strides=stride, padding=[(pad_h, pad_h), (pad_w, pad_w)],
        rhs_dilation=dilation,
        dimension_numbers=("NCHW", "OIHW", "NCHW"))
    out = jnp.round(out).astype(jnp.int32)
    bias_mul = 1 << (input_n_frac + weight_n_frac - bias_n_frac)
    out = out + bias.astype(jnp.int32).reshape(1, -1, 1, 1) * bias_mul
    inv_scale = 1.0 / (1 << (input_n_frac + weight_n_frac - output_n_frac))
    out = out.astype(jnp.float32) * inv_scale
    qmin, qmax = get_quantized_range(feature_bitwidth)
    return jnp.clip(out, float(qmin), float(qmax)).astype(jnp.int8)


if __name__ == "__main__":
    key = jax.random.PRNGKey(0)
    k1, k2, k3 = jax.random.split(key, 3)

    # Test 1: small conv -> single-K resident-weight kernel.
    N, Cin, H, W = 2, 4, 16, 16
    Cout, kh, kw_ = 8, 3, 3
    x = jax.random.randint(k1, (N, Cin, H, W), -128, 128).astype(jnp.int8)
    weight = jax.random.randint(k2, (Cout, Cin, kh, kw_), -128, 128).astype(jnp.int8)
    bias = jax.random.randint(k3, (Cout,), -64, 64).astype(jnp.int32)

    params = dict(weight_n_frac=5, bias_n_frac=9, input_n_frac=4, output_n_frac=3,
                  stride=(1, 1), padding=(1, 1), dilation=(1, 1))
    out = jax.block_until_ready(qconv2d(x, weight, bias, groups=1, **params))
    ref = _reference(x, weight, bias, **params)
    assert out.shape == ref.shape and out.dtype == jnp.int8
    assert jnp.array_equal(out, ref), "Pallas QConv2d does not match reference (test 1)"

    # Test 2: asymmetric padding + stride (exercises the (padding[1], padding[0]) swap).
    params2 = dict(weight_n_frac=4, bias_n_frac=8, input_n_frac=5, output_n_frac=4,
                   stride=(2, 2), padding=(1, 2), dilation=(1, 1))
    out2 = jax.block_until_ready(qconv2d(x, weight, bias, groups=1, **params2))
    ref2 = _reference(x, weight, bias, **params2)
    assert jnp.array_equal(out2, ref2), "Pallas QConv2d does not match reference (test 2)"

    # Test 3: force the multi-K accumulator kernel path via a tile override.
    k4, k5, k6 = jax.random.split(jax.random.PRNGKey(1), 3)
    x3 = jax.random.randint(k4, (1, 16, 8, 8), -128, 128).astype(jnp.int8)
    w3 = jax.random.randint(k5, (8, 16, 3, 3), -128, 128).astype(jnp.int8)
    b3 = jax.random.randint(k6, (8,), -64, 64).astype(jnp.int32)
    params3 = dict(weight_n_frac=5, bias_n_frac=9, input_n_frac=4, output_n_frac=3,
                   stride=(1, 1), padding=(1, 1), dilation=(1, 1))
    out3 = jax.block_until_ready(
        qconv2d(x3, w3, b3, groups=1, tile_override=(128, 128, 128), **params3))
    ref3 = _reference(x3, w3, b3, **params3)
    assert jnp.array_equal(out3, ref3), "Pallas QConv2d does not match reference (test 3)"

    print("KERNEL_OK")
</pallas_src>

<mosaic_0001>
module attributes {stable_mosaic.version = 11 : i64} {
  func.func @_qconv_kernel_single_k(%arg0: i32, %arg1: i32, %arg2: i32, %arg3: memref<256x128xbf16, #tpu.memory_space<vmem>>, %arg4: memref<128x128xbf16, #tpu.memory_space<vmem>>, %arg5: memref<1x128xf32, #tpu.memory_space<vmem>>, %arg6: memref<256x128xi8, #tpu.memory_space<vmem>>) attributes {dimension_semantics = [#tpu.dimension_semantics<parallel>, #tpu.dimension_semantics<parallel>, #tpu.dimension_semantics<arbitrary>], iteration_bounds = array<i64: 2, 1, 1>, scalar_prefetch = 0 : i64, scratch_operands = 0 : i64, tpu.core_type = #tpu.core_type<tc>, window_params = [{transform_indices = @transform_0, window_bounds = array<i64: 256, 128>}, {transform_indices = @transform_1, window_bounds = array<i64: 128, 128>}, {transform_indices = @transform_2, window_bounds = array<i64: 1, 128>}, {transform_indices = @transform_3, window_bounds = array<i64: 256, 128>}]} {
    %c0 = arith.constant 0 : index
    %c0_0 = arith.constant 0 : index
    %0 = vector.load %arg3[%c0, %c0_0] : memref<256x128xbf16, #tpu.memory_space<vmem>>, vector<256x128xbf16>
    %c0_1 = arith.constant 0 : index
    %c0_2 = arith.constant 0 : index
    %1 = vector.load %arg4[%c0_1, %c0_2] : memref<128x128xbf16, #tpu.memory_space<vmem>>, vector<128x128xbf16>
    %cst = arith.constant dense<0.000000e+00> : vector<256x128xf32>
    %2 = tpu.matmul %0, %1, %cst {dimension_numbers = #tpu.dot_dimension_numbers<[1], [0], [0], [1], [0, 0, 1, 1], [], []>} : vector<256x128xbf16>, vector<128x128xbf16>, vector<256x128xf32> -> vector<256x128xf32>
    %3 = math.roundeven %2 : vector<256x128xf32>
    %c0_3 = arith.constant 0 : index
    %c0_4 = arith.constant 0 : index
    %4 = vector.load %arg5[%c0_3, %c0_4] : memref<1x128xf32, #tpu.memory_space<vmem>>, vector<1x128xf32>
    %5 = vector.broadcast %4 : vector<1x128xf32> to vector<256x128xf32>
    %6 = arith.addf %3, %5 : vector<256x128xf32>
    %cst_5 = arith.constant 1.562500e-02 : f32
    %7 = vector.broadcast %cst_5 : f32 to vector<256x128xf32>
    %8 = arith.mulf %6, %7 : vector<256x128xf32>
    %cst_6 = arith.constant -1.280000e+02 : f32
    %cst_7 = arith.constant 1.270000e+02 : f32
    %9 = vector.broadcast %cst_6 : f32 to vector<256x128xf32>
    %10 = arith.maximumf %9, %8 : vector<256x128xf32>
    %11 = vector.broadcast %cst_7 : f32 to vector<256x128xf32>
    %12 = arith.minimumf %11, %10 : vector<256x128xf32>
    %13 = arith.fptosi %12 : vector<256x128xf32> to vector<256x128xi8>
    %c0_8 = arith.constant 0 : index
    %c0_9 = arith.constant 0 : index
    %14 = vector.load %arg6[%c0_8, %c0_9] : memref<256x128xi8, #tpu.memory_space<vmem>>, vector<256x128xi8>
    tpu.vector_store %arg6[%c0_8, %c0_9], %13 {strides = array<i32>} : memref<256x128xi8, #tpu.memory_space<vmem>>, vector<256x128xi8>,
    return
  }
  func.func @transform_0(%arg0: i32, %arg1: i32, %arg2: i32) -> (i32, i32) {
    %c0_i32 = arith.constant 0 : i32
    return %arg0, %arg2 : i32, i32
  }
  func.func @transform_1(%arg0: i32, %arg1: i32, %arg2: i32) -> (i32, i32) {
    %c0_i32 = arith.constant 0 : i32
    return %arg2, %arg1 : i32, i32
  }
  func.func @transform_2(%arg0: i32, %arg1: i32, %arg2: i32) -> (i32, i32) {
    %c0_i32 = arith.constant 0 : i32
    %c0_i32_0 = arith.constant 0 : i32
    return %c0_i32, %arg1 : i32, i32
  }
  func.func @transform_3(%arg0: i32, %arg1: i32, %arg2: i32) -> (i32, i32) {
    %c0_i32 = arith.constant 0 : i32
    return %arg0, %arg1 : i32, i32
  }
}

</mosaic_0001>

<llo_original>
// kernel: tpu_custom_call.1
$region0: #{tpu_custom_call.1}
  #allocation0 [shape = 'u32[]', space=smem, size = 0x4, offset = 0x4, fixed_abs, tag = 'smem constant byte address 0x4 - core index']
  #allocation1 [shape = 'u32[72,128]{1,0:T(1,128)}', space=vmem, size = 0x9000, scoped, tag = 'internal scratch']
  %s0 = inlined_call_operand.hbm [shape: bf16[512,128], index: 0, kind: input, shape index: {}]
  %s1 = inlined_call_operand.hbm [shape: bf16[128,128], index: 1, kind: input, shape index: {}]
  %s2 = inlined_call_operand.vmem [shape: f32[1,128], index: 2, kind: input, shape index: {}]
  %s3 = inlined_call_operand.hbm [shape: s8[512,128], index: 3, kind: output, shape index: {}]
  %s4 = sld [smem:[#allocation0]]
  $region53: #{tpu_custom_call.1} parent=0
    _
  %s6 = ssub.s32 1, %s4
  %s7 = scalar_select 0, %s6, %s4
  $region1: #{tpu_custom_call.1} parent=0
    #allocation2 [shape = 'u8[131072]{0}', space=vmem, size = 0x20000, scoped, tag = 'input window, operand 0']
    #allocation3 [shape = 's32[2]{0}', space=sflag, size = 0x8, scoped, tag = 'scoped memory for tpu_custom_call.1']
    #allocation4 [shape = 's32[2]{0}', space=sflag, size = 0x8, scoped, tag = 'scoped memory for tpu_custom_call.1']
    #allocation5 [shape = 'u8[32768]{0}', space=vmem, size = 0x8000, scoped, tag = 'input window, operand 1, single buffered']
    #allocation6 [shape = 's32[1]{0}', space=sflag, size = 0x4, scoped, tag = 'scoped memory for tpu_custom_call.1']
    #allocation7 [shape = 'u8[65536]{0}', space=vmem, size = 0x10000, scoped, tag = 'output window, operand 0']
    %8 = vsyncpa [#allocation3], 0
    %s9 = scalar_lea.sflag [#allocation3], 1
    %10 = vsyncpa %s9, 0
    %11 = vsyncpa [#allocation6], 0
    %12 = vsyncpa [#allocation4], 0
    %s13 = scalar_lea.sflag [#allocation4], 1
    %14 = vsyncpa %s13, 0
    loop: start=0, step=1, limit=4
    $region2: #{tpu_custom_call.1} parent=1 // loop_pre_header
      _
    $region3: #{tpu_custom_call.1} parent=1 // loop_header
      %s16 = sphi 0, %s20
      %p17 = scmp.ge.s32.totalorder %s16, 4
      %s23 = sphi 0, %s42
      %s24 = sphi 0, %s38
      %s25 = sphi 0, %s34
      %s26 = sphi 0, %s23
      %s27 = sphi 0, %s24
      %s28 = sphi 0, %s25
      %s29 = sphi 0, %s26
      %s30 = sphi 0, %s27
      %s31 = sphi 0, %s28
      %s47 = sphi 0, %s49
      %s50 = sphi 0, %s47
      %s51 = sphi 0, %s50
      %s67 = sphi 0, %s51
      %s75 = sphi 0, %s77
      %s78 = sphi 0, %s75
      %s79 = sphi 0, %s78
      %s95 = sphi 0, %s79
      %s101 = sphi 0, %s103
      %s104 = sphi 0, %s101
      %s105 = sphi 0, %s104
      %s121 = sphi 0, %s105
      %s129 = sphi 0, %s131
      %s132 = sphi 0, %s129
      %s133 = sphi 0, %s132
      %s149 = sphi 0, %s133
    $region4: #{tpu_custom_call.1} parent=1 // loop_header_branch
      %19 = sbr.rel (%p17) target = $region8
    $region5: #{tpu_custom_call.1} parent=1 // loop_body
      %s21 = ssub.s32 %s16, 1
      %s22 = ssub.s32 %s16, 2
      %s32 = sadd.s32 1, %s25
      %p33 = scmp.ge.s32.totalorder %s32, 1
      %s34 = scalar_select %p33, 0, %s32
      %s35 = sadd.s32 1, %s24
      %s36 = scalar_select %p33, %s35, %s24
      %p37 = scmp.ge.s32.totalorder %s36, 1
      %s38 = scalar_select %p37, 0, %s36
      %s39 = sadd.s32 1, %s23
      %s40 = scalar_select %p37, %s39, %s23
      %p41 = scmp.ge.s32.totalorder %s40, 2
      %s42 = scalar_select %p41, 0, %s40
      %s43 = ssub.s32 %s23, %s42
      %s44 = ssub.s32 %s25, %s34
      %s45 = sor.u32 %s43, %s44
      %p46 = scmp.eq.s32.totalorder %s45, 0
      %s48 = sadd.s32 %s47, 1
      %s49 = scalar_select %p46, %s47, %s48
      %p52 = pneg %p46
      %p53 = scmp.eq.s32.totalorder %s16, 1
      %p54 = por %p52, %p53
      %p55 = scmp.ne.s32.totalorder %s47, %s50
      %p56 = scmp.eq.s32.totalorder %s16, 0
      %p57 = por %p55, %p56
      %p58 = scmp.ne.s32.totalorder %s47, %s50
      %p59 = scmp.eq.s32.totalorder %s21, 1
      %p60 = por %p58, %p59
      %p61 = scmp.ne.s32.totalorder %s50, %s51
      %p62 = scmp.eq.s32.totalorder %s21, 0
      %p63 = por %p61, %p62
      %p64 = scmp.ne.s32.totalorder %s50, %s51
      %p65 = scmp.eq.s32.totalorder %s22, 1
      %p66 = por %p64, %p65
      %p68 = scmp.ne.s32.totalorder %s51, %s67
      %p69 = scmp.eq.s32.totalorder %s22, 0
      %p70 = por %p68, %p69
      %s71 = ssub.s32 %s25, %s34
      %s72 = ssub.s32 %s24, %s38
      %s73 = sor.u32 %s71, %s72
      %p74 = scmp.eq.s32.totalorder %s73, 0
      %s76 = sadd.s32 %s75, 1
      %s77 = scalar_select %p74, %s75, %s76
      %p80 = pneg %p74
      %p81 = scmp.eq.s32.totalorder %s16, 1
      %p82 = por %p80, %p81
      %p83 = scmp.ne.s32.totalorder %s75, %s78
      %p84 = scmp.eq.s32.totalorder %s16, 0
      %p85 = por %p83, %p84
      %p86 = scmp.ne.s32.totalorder %s75, %s78
      %p87 = scmp.eq.s32.totalorder %s21, 1
      %p88 = por %p86, %p87
      %p89 = scmp.ne.s32.totalorder %s78, %s79
      %p90 = scmp.eq.s32.totalorder %s21, 0
      %p91 = por %p89, %p90
      %p92 = scmp.ne.s32.totalorder %s78, %s79
      %p93 = scmp.eq.s32.totalorder %s22, 1
      %p94 = por %p92, %p93
      %p96 = scmp.ne.s32.totalorder %s79, %s95
      %p97 = scmp.eq.s32.totalorder %s22, 0
      %p98 = por %p96, %p97
      %s99 = ssub.s32 %s24, %s38
      %p100 = scmp.eq.s32.totalorder %s99, 0
      %s102 = sadd.s32 %s101, 1
      %s103 = scalar_select %p100, %s101, %s102
      %p106 = pneg %p100
      %p107 = scmp.eq.s32.totalorder %s16, 1
      %p108 = por %p106, %p107
      %p109 = scmp.ne.s32.totalorder %s101, %s104
      %p110 = scmp.eq.s32.totalorder %s16, 0
      %p111 = por %p109, %p110
      %p112 = scmp.ne.s32.totalorder %s101, %s104
      %p113 = scmp.eq.s32.totalorder %s21, 1
      %p114 = por %p112, %p113
      %p115 = scmp.ne.s32.totalorder %s104, %s105
      %p116 = scmp.eq.s32.totalorder %s21, 0
      %p117 = por %p115, %p116
      %p118 = scmp.ne.s32.totalorder %s104, %s105
      %p119 = scmp.eq.s32.totalorder %s22, 1
      %p120 = por %p118, %p119
      %p122 = scmp.ne.s32.totalorder %s105, %s121
      %p123 = scmp.eq.s32.totalorder %s22, 0
      %p124 = por %p122, %p123
      %s125 = ssub.s32 %s23, %s42
      %s126 = ssub.s32 %s24, %s38
      %s127 = sor.u32 %s125, %s126
      %p128 = scmp.eq.s32.totalorder %s127, 0
      %s130 = sadd.s32 %s129, 1
      %s131 = scalar_select %p128, %s129, %s130
      %p134 = pneg %p128
      %p135 = scmp.eq.s32.totalorder %s16, 1
      %p136 = por %p134, %p135
      %p137 = scmp.ne.s32.totalorder %s129, %s132
      %p138 = scmp.eq.s32.totalorder %s16, 0
      %p139 = por %p137, %p138
      %p140 = scmp.ne.s32.totalorder %s129, %s132
      %p141 = scmp.eq.s32.totalorder %s21, 1
      %p142 = por %p140, %p141
      %p143 = scmp.ne.s32.totalorder %s132, %s133
      %p144 = scmp.eq.s32.totalorder %s21, 0
      %p145 = por %p143, %p144
      %p146 = scmp.ne.s32.totalorder %s132, %s133
      %p147 = scmp.eq.s32.totalorder %s22, 1
      %p148 = por %p146, %p147
      %p150 = scmp.ne.s32.totalorder %s133, %s149
      %p151 = scmp.eq.s32.totalorder %s22, 0
      %p152 = por %p150, %p151
      %p153 = scmp.le.s32.totalorder 1, %s16
      %p154 = scmp.lt.s32.totalorder %s16, 3
      %p155 = pnand %p153, %p154
      %p156 = pneg %p155
      // Predicated region
      $region9: #{tpu_custom_call.1} parent=5 // pred_check
        _
      $region10: #{tpu_custom_call.1} parent=5 // pred_check_branch
        %158 = sbr.rel (%p155) target = $region12
      $region11: #{tpu_custom_call.1} parent=5 // pred_region
        %s159 = ssub.s32 %s16, 1
        // Predicated region
        $region13: #{tpu_custom_call.1} parent=11 // pred_check
          %p160 = pneg %p91
        $region14: #{tpu_custom_call.1} parent=11 // pred_check_branch
          %162 = sbr.rel (%p160) target = $region16
        $region15: #{tpu_custom_call.1} parent=11 // pred_region
          %s163 = smul.u32 16, %s28
          %165 = vsyncadd [#allocation6], 0
          %s166 = sadd.s32 %s27, %s163
          %s167 = smul.addr %s166, 4
          %s168 = scalar_lea.hbm %s1, %s167
          %s169 = sshll.u32 %s168, 4
          %s170 = int_to_ptr.hbm [resolvable:$true] %s169
          %s171 = sshll.u32 [#allocation5], 4
          %s172 = int_to_ptr.vmem [resolvable:$true] %s171
          %177 = dma.hbm_to_vmem [thread:$0]  %s170, 1024, %s172, [#allocation6], 64, 64, 4
        $region16: #{tpu_custom_call.1} parent=11 // pred_fallthru
          _
        // Predicated region
        $region17: #{tpu_custom_call.1} parent=11 // pred_check
          %p178 = pneg %p117
        $region18: #{tpu_custom_call.1} parent=11 // pred_check_branch
          %180 = sbr.rel (%p178) target = $region20
        $region19: #{tpu_custom_call.1} parent=11 // pred_region
          %p181 = scmp.lt.s32.totalorder %s27, 0
          %s182 = scalar_select %p181, %s27, 0
          %s183 = scalar_lea.vmem %s2, %s182
        $region20: #{tpu_custom_call.1} parent=11 // pred_fallthru
          _
      $region12: #{tpu_custom_call.1} parent=5 // pred_fallthru
        _
      %p184 = scmp.lt.s32.totalorder %s16, 2
      // Predicated region
      $region21: #{tpu_custom_call.1} parent=5 // pred_check
        %p185 = pneg %p184
      $region22: #{tpu_custom_call.1} parent=5 // pred_check_branch
        %187 = sbr.rel (%p185) target = $region24
      $region23: #{tpu_custom_call.1} parent=5 // pred_region
        // Predicated region
        $region25: #{tpu_custom_call.1} parent=23 // pred_check
          %p188 = pneg %p57
        $region26: #{tpu_custom_call.1} parent=23 // pred_check_branch
          %190 = sbr.rel (%p188) target = $region28
        $region27: #{tpu_custom_call.1} parent=23 // pred_region
          %s191 = sand.u32 %s47, 1
          %s192 = scalar_lea.sflag [#allocation3], %s191
          %s193 = sand.u32 %s47, 1
          %s194 = smul.addr %s193, 128
          %s195 = scalar_lea.vmem [#allocation2], %s194
          %s196 = smul.u32 32, %s23
          %198 = vsyncadd %s192, 0
          %s199 = sadd.s32 %s25, %s196
          %s200 = smul.addr %s199, 4
          %s201 = scalar_lea.hbm %s0, %s200
          %s202 = sshll.u32 %s201, 4
          %s203 = int_to_ptr.hbm [resolvable:$true] %s202
          %s204 = sshll.u32 %s195, 4
          %s205 = int_to_ptr.vmem [resolvable:$true] %s204
          %210 = dma.hbm_to_vmem [thread:$0]  %s203, 2048, %s205, %s192, 64, 64, 4
        $region28: #{tpu_custom_call.1} parent=23 // pred_fallthru
          _
      $region24: #{tpu_custom_call.1} parent=5 // pred_fallthru
        _
      %p211 = scmp.le.s32.totalorder 1, %s16
      %p212 = scmp.lt.s32.totalorder %s16, 3
      %p213 = pnand %p211, %p212
      %p214 = pneg %p213
      // Predicated region
      $region29: #{tpu_custom_call.1} parent=5 // pred_check
        _
      $region30: #{tpu_custom_call.1} parent=5 // pred_check_branch
        %216 = sbr.rel (%p213) target = $region32
      $region31: #{tpu_custom_call.1} parent=5 // pred_region
        %s217 = ssub.s32 %s16, 1
        %s218 = sand.u32 %s50, 1
        %s219 = scalar_lea.sflag [#allocation3], %s218
        %s220 = sand.u32 %s50, 1
        %s221 = smul.addr %s220, 128
        %s222 = scalar_lea.vmem [#allocation2], %s221
        // Predicated region
        $region33: #{tpu_custom_call.1} parent=31 // pred_check
          %p223 = pneg %p63
        $region34: #{tpu_custom_call.1} parent=31 // pred_check_branch
          %225 = sbr.rel (%p223) target = $region36
        $region35: #{tpu_custom_call.1} parent=31 // pred_region
          %227 = dma.done %s219, 2048
        $region36: #{tpu_custom_call.1} parent=31 // pred_fallthru
          _
        // Predicated region
        $region37: #{tpu_custom_call.1} parent=31 // pred_check
          %p228 = pneg %p91
        $region38: #{tpu_custom_call.1} parent=31 // pred_check_branch
          %230 = sbr.rel (%p228) target = $region40
        $region39: #{tpu_custom_call.1} parent=31 // pred_region
          %232 = dma.done [#allocation6], 1024
        $region40: #{tpu_custom_call.1} parent=31 // pred_fallthru
          _
        %s233 = sand.u32 %s50, 1
        %s234 = scalar_lea.sflag [#allocation3], %s233
        %s235 = sand.u32 %s50, 1
        %s236 = smul.addr %s235, 128
        %s237 = scalar_lea.vmem [#allocation2], %s236
        %p238 = pneg %p63
        %p239 = pneg %p60
        %p240 = pneg %p91
        %p241 = pneg %p88
        %p242 = scmp.lt.s32.totalorder %s27, 0
        %s243 = scalar_select %p242, %s27, 0
        %s244 = scalar_lea.vmem %s2, %s243
        %p245 = pneg %p117
        %p246 = pneg %p114
        %p247 = pneg %p145
        %p248 = pneg %p142
        %s249 = sand.u32 %s132, 1
        %s250 = scalar_lea.sflag [#allocation4], %s249
        %s251 = sand.u32 %s132, 1
        %s252 = smul.addr %s251, 64
        %s253 = scalar_lea.vmem [#allocation7], %s252
        %s254 = smul.u32 32, %s26
        %s255 = smul.u32 16, %s28
        %p256 = scmp.lt.s32.totalorder %s27, 0
        %s257 = scalar_select %p256, %s27, 0
        %s258 = scalar_lea.vmem %s2, %s257
        %s259 = smul.u32 8, %s26
        %v260 = vld [vmem:[%s222] sm:$0xf]
        %v261 = vld [vmem:[%s222 + $0x4] sm:$0xf]
        %v262 = vld [vmem:[%s222 + $0x8] sm:$0xf]
        %v263 = vld [vmem:[%s222 + $0xc] sm:$0xf]
        %v264 = vld [vmem:[%s222 + $0x10] sm:$0xf]
        %v265 = vld [vmem:[%s222 + $0x14] sm:$0xf]
        %v266 = vld [vmem:[%s222 + $0x18] sm:$0xf]
        %v267 = vld [vmem:[%s222 + $0x1c] sm:$0xf]
        %v268 = vld [vmem:[%s222 + $0x20] sm:$0xf]
        %v269 = vld [vmem:[%s222 + $0x24] sm:$0xf]
        %v270 = vld [vmem:[%s222 + $0x28] sm:$0xf]
        %v271 = vld [vmem:[%s222 + $0x2c] sm:$0xf]
        %v272 = vld [vmem:[%s222 + $0x30] sm:$0xf]
        %v273 = vld [vmem:[%s222 + $0x34] sm:$0xf]
        %v274 = vld [vmem:[%s222 + $0x38] sm:$0xf]
        %v275 = vld [vmem:[%s222 + $0x3c] sm:$0xf]
        %v276 = vld [vmem:[%s222 + $0x40] sm:$0xf]
        %v277 = vld [vmem:[%s222 + $0x44] sm:$0xf]
        %v278 = vld [vmem:[%s222 + $0x48] sm:$0xf]
        %v279 = vld [vmem:[%s222 + $0x4c] sm:$0xf]
        %v280 = vld [vmem:[%s222 + $0x50] sm:$0xf]
        %v281 = vld [vmem:[%s222 + $0x54] sm:$0xf]
        %v282 = vld [vmem:[%s222 + $0x58] sm:$0xf]
        %v283 = vld [vmem:[%s222 + $0x5c] sm:$0xf]
        %v284 = vld [vmem:[%s222 + $0x60] sm:$0xf]
        %v285 = vld [vmem:[%s222 + $0x64] sm:$0xf]
        %v286 = vld [vmem:[%s222 + $0x68] sm:$0xf]
        %v287 = vld [vmem:[%s222 + $0x6c] sm:$0xf]
        %v288 = vld [vmem:[%s222 + $0x70] sm:$0xf]
        %v289 = vld [vmem:[%s222 + $0x74] sm:$0xf]
        %v290 = vld [vmem:[%s222 + $0x78] sm:$0xf]
        %v291 = vld [vmem:[%s222 + $0x7c] sm:$0xf]
        %v292 = vld [vmem:[#allocation5] sm:$0xf]
        %v293 = vld [vmem:[#allocation5 + $0x4] sm:$0xf]
        %v294 = vld [vmem:[#allocation5 + $0x8] sm:$0xf]
        %v295 = vld [vmem:[#allocation5 + $0xc] sm:$0xf]
        %v296 = vld [vmem:[#allocation5 + $0x10] sm:$0xf]
        %v297 = vld [vmem:[#allocation5 + $0x14] sm:$0xf]
        %v298 = vld [vmem:[#allocation5 + $0x18] sm:$0xf]
        %v299 = vld [vmem:[#allocation5 + $0x1c] sm:$0xf]
        %v300 = vld [vmem:[#allocation5 + $0x20] sm:$0xf]
        %v301 = vld [vmem:[#allocation5 + $0x24] sm:$0xf]
        %v302 = vld [vmem:[#allocation5 + $0x28] sm:$0xf]
        %v303 = vld [vmem:[#allocation5 + $0x2c] sm:$0xf]
        %v304 = vld [vmem:[#allocation5 + $0x30] sm:$0xf]
        %v305 = vld [vmem:[#allocation5 + $0x34] sm:$0xf]
        %v306 = vld [vmem:[#allocation5 + $0x38] sm:$0xf]
        %v307 = vld [vmem:[#allocation5 + $0x3c] sm:$0xf]
        %v340 = vunpack.c.l.b16 %v260
        %v341 = vunpack.c.l.b16 %v261
        %v342 = vunpack.c.l.b16 %v262
        %v343 = vunpack.c.l.b16 %v263
        %v344 = vunpack.c.l.b16 %v264
        %v345 = vunpack.c.l.b16 %v265
        %v346 = vunpack.c.l.b16 %v266
        %v347 = vunpack.c.l.b16 %v267
        %v348 = vunpack.c.l.b16 %v268
        %v349 = vunpack.c.l.b16 %v269
        %v350 = vunpack.c.l.b16 %v270
        %v351 = vunpack.c.l.b16 %v271
        %v352 = vunpack.c.l.b16 %v272
        %v353 = vunpack.c.l.b16 %v273
        %v354 = vunpack.c.l.b16 %v274
        %v355 = vunpack.c.l.b16 %v275
        %v356 = vunpack.c.l.b16 %v276
        %v357 = vunpack.c.l.b16 %v277
        %v358 = vunpack.c.l.b16 %v278
        %v359 = vunpack.c.l.b16 %v279
        %v360 = vunpack.c.l.b16 %v280
        %v361 = vunpack.c.l.b16 %v281
        %v362 = vunpack.c.l.b16 %v282
        %v363 = vunpack.c.l.b16 %v283
        %v364 = vunpack.c.l.b16 %v284
        %v365 = vunpack.c.l.b16 %v285
        %v366 = vunpack.c.l.b16 %v286
        %v367 = vunpack.c.l.b16 %v287
        %v368 = vunpack.c.l.b16 %v288
        %v369 = vunpack.c.l.b16 %v289
        %v370 = vunpack.c.l.b16 %v290
        %v371 = vunpack.c.l.b16 %v291
        %v372 = vpack.c.b16 %v341, %v340
        %v373 = vpack.c.b16 %v343, %v342
        %v374 = vpack.c.b16 %v345, %v344
        %v375 = vpack.c.b16 %v347, %v346
        %v376 = vpack.c.b16 %v349, %v348
        %v377 = vpack.c.b16 %v351, %v350
        %v378 = vpack.c.b16 %v353, %v352
        %v379 = vpack.c.b16 %v355, %v354
        %v380 = vpack.c.b16 %v357, %v356
        %v381 = vpack.c.b16 %v359, %v358
        %v382 = vpack.c.b16 %v361, %v360
        %v383 = vpack.c.b16 %v363, %v362
        %v384 = vpack.c.b16 %v365, %v364
        %v385 = vpack.c.b16 %v367, %v366
        %v386 = vpack.c.b16 %v369, %v368
        %v387 = vpack.c.b16 %v371, %v370
        %v420 = vunpack.c.l.b16 %v292
        %v421 = vunpack.c.l.b16 %v293
        %v422 = vunpack.c.l.b16 %v294
        %v423 = vunpack.c.l.b16 %v295
        %v424 = vunpack.c.l.b16 %v296
        %v425 = vunpack.c.l.b16 %v297
        %v426 = vunpack.c.l.b16 %v298
        %v427 = vunpack.c.l.b16 %v299
        %v428 = vunpack.c.l.b16 %v300
        %v429 = vunpack.c.l.b16 %v301
        %v430 = vunpack.c.l.b16 %v302
        %v431 = vunpack.c.l.b16 %v303
        %v432 = vunpack.c.l.b16 %v304
        %v433 = vunpack.c.l.b16 %v305
        %v434 = vunpack.c.l.b16 %v306
        %v435 = vunpack.c.l.b16 %v307
        %v436 = vpack.c.b16 %v421, %v420
        %v437 = vpack.c.b16 %v423, %v422
        %v438 = vpack.c.b16 %v425, %v424
        %v439 = vpack.c.b16 %v427, %v426
        %v440 = vpack.c.b16 %v429, %v428
        %v441 = vpack.c.b16 %v431, %v430
        %v442 = vpack.c.b16 %v433, %v432
        %v443 = vpack.c.b16 %v435, %v434
        %452 = vmatpush.bf16.msra.mxu0 %v443
        %453 = vmatpush.bf16.msra.mxu0 %v442
        %454 = vmatpush.bf16.msra.mxu0 %v441
        %455 = vmatpush.bf16.msra.mxu0 %v440
        %456 = vmatpush.bf16.msra.mxu0 %v439
        %457 = vmatpush.bf16.msra.mxu0 %v438
        %458 = vmatpush.bf16.msra.mxu0 %v437
        %459 = vmatpush.bf16.msra.mxu0 %v436
        %460 = vmatmul.bf16.gmra.mxu0 %v372
        %v461 = vpop.f32.mrf.mxu0
        %v462 = vadd.f32 0.0, %v461
        %v463 = vpop.f32.mrf.mxu0
        %v464 = vadd.f32 0.0, %v463
        %465 = vmatmul.bf16.gmra.mxu0 %v373
        %v466 = vpop.f32.mrf.mxu0
        %v467 = vadd.f32 0.0, %v466
        %v468 = vpop.f32.mrf.mxu0
        %v469 = vadd.f32 0.0, %v468
        %470 = vmatmul.bf16.gmra.mxu0 %v374
        %v471 = vpop.f32.mrf.mxu0
        %v472 = vadd.f32 0.0, %v471
        %v473 = vpop.f32.mrf.mxu0
        %v474 = vadd.f32 0.0, %v473
        %475 = vmatmul.bf16.gmra.mxu0 %v375
        %v476 = vpop.f32.mrf.mxu0
        %v477 = vadd.f32 0.0, %v476
        %v478 = vpop.f32.mrf.mxu0
        %v479 = vadd.f32 0.0, %v478
        %480 = vmatmul.bf16.gmra.mxu0 %v376
        %v481 = vpop.f32.mrf.mxu0
        %v482 = vadd.f32 0.0, %v481
        %v483 = vpop.f32.mrf.mxu0
        %v484 = vadd.f32 0.0, %v483
        %485 = vmatmul.bf16.gmra.mxu0 %v377
        %v486 = vpop.f32.mrf.mxu0
        %v487 = vadd.f32 0.0, %v486
        %v488 = vpop.f32.mrf.mxu0
        %v489 = vadd.f32 0.0, %v488
        %490 = vmatmul.bf16.gmra.mxu0 %v378
        %v491 = vpop.f32.mrf.mxu0
        %v492 = vadd.f32 0.0, %v491
        %v493 = vpop.f32.mrf.mxu0
        %v494 = vadd.f32 0.0, %v493
        %495 = vmatmul.bf16.gmra.mxu0 %v379
        %v496 = vpop.f32.mrf.mxu0
        %v497 = vadd.f32 0.0, %v496
        %v498 = vpop.f32.mrf.mxu0
        %v499 = vadd.f32 0.0, %v498
        %500 = vmatmul.bf16.gmra.mxu0 %v380
        %v501 = vpop.f32.mrf.mxu0
        %v502 = vadd.f32 0.0, %v501
        %v503 = vpop.f32.mrf.mxu0
        %v504 = vadd.f32 0.0, %v503
        %505 = vmatmul.bf16.gmra.mxu0 %v381
        %v506 = vpop.f32.mrf.mxu0
        %v507 = vadd.f32 0.0, %v506
        %v508 = vpop.f32.mrf.mxu0
        %v509 = vadd.f32 0.0, %v508
        %510 = vmatmul.bf16.gmra.mxu0 %v382
        %v511 = vpop.f32.mrf.mxu0
        %v512 = vadd.f32 0.0, %v511
        %v513 = vpop.f32.mrf.mxu0
        %v514 = vadd.f32 0.0, %v513
        %515 = vmatmul.bf16.gmra.mxu0 %v383
        %v516 = vpop.f32.mrf.mxu0
        %v517 = vadd.f32 0.0, %v516
        %v518 = vpop.f32.mrf.mxu0
        %v519 = vadd.f32 0.0, %v518
        %520 = vmatmul.bf16.gmra.mxu0 %v384
        %v521 = vpop.f32.mrf.mxu0
        %v522 = vadd.f32 0.0, %v521
        %v523 = vpop.f32.mrf.mxu0
        %v524 = vadd.f32 0.0, %v523
        %525 = vmatmul.bf16.gmra.mxu0 %v385
        %v526 = vpop.f32.mrf.mxu0
        %v527 = vadd.f32 0.0, %v526
        %v528 = vpop.f32.mrf.mxu0
        %v529 = vadd.f32 0.0, %v528
        %530 = vmatmul.bf16.gmra.mxu0 %v386
        %v531 = vpop.f32.mrf.mxu0
        %v532 = vadd.f32 0.0, %v531
        %v533 = vpop.f32.mrf.mxu0
        %v534 = vadd.f32 0.0, %v533
        %535 = vmatmul.bf16.gmra.mxu0 %v387
        %v536 = vpop.f32.mrf.mxu0
        %v537 = vadd.f32 0.0, %v536
        %v538 = vpop.f32.mrf.mxu0
        %v539 = vadd.f32 0.0, %v538
        %540 = vdwg.mxu0
        %v541 = vround.ne.pseudo %v462
        %v542 = vround.ne.pseudo %v464
        %v543 = vround.ne.pseudo %v467
        %v544 = vround.ne.pseudo %v469
        %v545 = vround.ne.pseudo %v472
        %v546 = vround.ne.pseudo %v474
        %v547 = vround.ne.pseudo %v477
        %v548 = vround.ne.pseudo %v479
        %v549 = vround.ne.pseudo %v482
        %v550 = vround.ne.pseudo %v484
        %v551 = vround.ne.pseudo %v487
        %v552 = vround.ne.pseudo %v489
        %v553 = vround.ne.pseudo %v492
        %v554 = vround.ne.pseudo %v494
        %v555 = vround.ne.pseudo %v497
        %v556 = vround.ne.pseudo %v499
        %v557 = vround.ne.pseudo %v502
        %v558 = vround.ne.pseudo %v504
        %v559 = vround.ne.pseudo %v507
        %v560 = vround.ne.pseudo %v509
        %v561 = vround.ne.pseudo %v512
        %v562 = vround.ne.pseudo %v514
        %v563 = vround.ne.pseudo %v517
        %v564 = vround.ne.pseudo %v519
        %v565 = vround.ne.pseudo %v522
        %v566 = vround.ne.pseudo %v524
        %v567 = vround.ne.pseudo %v527
        %v568 = vround.ne.pseudo %v529
        %v569 = vround.ne.pseudo %v532
        %v570 = vround.ne.pseudo %v534
        %v571 = vround.ne.pseudo %v537
        %v572 = vround.ne.pseudo %v539
        %v573 = vld [vmem:[%s258] sm:$0x1]
        %v575 = vperm.slane %v573, 0
        %v577 = vadd.f32 %v541, %v575
        %v578 = vadd.f32 %v542, %v575
        %v579 = vadd.f32 %v543, %v575
        %v580 = vadd.f32 %v544, %v575
        %v581 = vadd.f32 %v545, %v575
        %v582 = vadd.f32 %v546, %v575
        %v583 = vadd.f32 %v547, %v575
        %v584 = vadd.f32 %v548, %v575
        %v585 = vadd.f32 %v549, %v575
        %v586 = vadd.f32 %v550, %v575
        %v587 = vadd.f32 %v551, %v575
        %v588 = vadd.f32 %v552, %v575
        %v589 = vadd.f32 %v553, %v575
        %v590 = vadd.f32 %v554, %v575
        %v591 = vadd.f32 %v555, %v575
        %v592 = vadd.f32 %v556, %v575
        %v593 = vadd.f32 %v557, %v575
        %v594 = vadd.f32 %v558, %v575
        %v595 = vadd.f32 %v559, %v575
        %v596 = vadd.f32 %v560, %v575
        %v597 = vadd.f32 %v561, %v575
        %v598 = vadd.f32 %v562, %v575
        %v599 = vadd.f32 %v563, %v575
        %v600 = vadd.f32 %v564, %v575
        %v601 = vadd.f32 %v565, %v575
        %v602 = vadd.f32 %v566, %v575
        %v603 = vadd.f32 %v567, %v575
        %v604 = vadd.f32 %v568, %v575
        %v605 = vadd.f32 %v569, %v575
        %v606 = vadd.f32 %v570, %v575
        %v607 = vadd.f32 %v571, %v575
        %v608 = vadd.f32 %v572, %v575
        %v609 = vmul.f32 %v577, 0.015625
        %v610 = vmul.f32 %v578, 0.015625
        %v611 = vmul.f32 %v579, 0.015625
        %v612 = vmul.f32 %v580, 0.015625
        %v613 = vmul.f32 %v581, 0.015625
        %v614 = vmul.f32 %v582, 0.015625
        %v615 = vmul.f32 %v583, 0.015625
        %v616 = vmul.f32 %v584, 0.015625
        %v617 = vmul.f32 %v585, 0.015625
        %v618 = vmul.f32 %v586, 0.015625
        %v619 = vmul.f32 %v587, 0.015625
        %v620 = vmul.f32 %v588, 0.015625
        %v621 = vmul.f32 %v589, 0.015625
        %v622 = vmul.f32 %v590, 0.015625
        %v623 = vmul.f32 %v591, 0.015625
        %v624 = vmul.f32 %v592, 0.015625
        %v625 = vmul.f32 %v593, 0.015625
        %v626 = vmul.f32 %v594, 0.015625
        %v627 = vmul.f32 %v595, 0.015625
        %v628 = vmul.f32 %v596, 0.015625
        %v629 = vmul.f32 %v597, 0.015625
        %v630 = vmul.f32 %v598, 0.015625
        %v631 = vmul.f32 %v599, 0.015625
        %v632 = vmul.f32 %v600, 0.015625
        %v633 = vmul.f32 %v601, 0.015625
        %v634 = vmul.f32 %v602, 0.015625
        %v635 = vmul.f32 %v603, 0.015625
        %v636 = vmul.f32 %v604, 0.015625
        %v637 = vmul.f32 %v605, 0.015625
        %v638 = vmul.f32 %v606, 0.015625
        %v639 = vmul.f32 %v607, 0.015625
        %v640 = vmul.f32 %v608, 0.015625
        %v641 = vmax.f32 %v609, -128.0
        %v642 = vmax.f32 %v610, -128.0
        %v643 = vmax.f32 %v611, -128.0
        %v644 = vmax.f32 %v612, -128.0
        %v645 = vmax.f32 %v613, -128.0
        %v646 = vmax.f32 %v614, -128.0
        %v647 = vmax.f32 %v615, -128.0
        %v648 = vmax.f32 %v616, -128.0
        %v649 = vmax.f32 %v617, -128.0
        %v650 = vmax.f32 %v618, -128.0
        %v651 = vmax.f32 %v619, -128.0
        %v652 = vmax.f32 %v620, -128.0
        %v653 = vmax.f32 %v621, -128.0
        %v654 = vmax.f32 %v622, -128.0
        %v655 = vmax.f32 %v623, -128.0
        %v656 = vmax.f32 %v624, -128.0
        %v657 = vmax.f32 %v625, -128.0
        %v658 = vmax.f32 %v626, -128.0
        %v659 = vmax.f32 %v627, -128.0
        %v660 = vmax.f32 %v628, -128.0
        %v661 = vmax.f32 %v629, -128.0
        %v662 = vmax.f32 %v630, -128.0
        %v663 = vmax.f32 %v631, -128.0
        %v664 = vmax.f32 %v632, -128.0
        %v665 = vmax.f32 %v633, -128.0
        %v666 = vmax.f32 %v634, -128.0
        %v667 = vmax.f32 %v635, -128.0
        %v668 = vmax.f32 %v636, -128.0
        %v669 = vmax.f32 %v637, -128.0
        %v670 = vmax.f32 %v638, -128.0
        %v671 = vmax.f32 %v639, -128.0
        %v672 = vmax.f32 %v640, -128.0
        %v673 = vmin.f32 %v641, 127.0
        %v674 = vmin.f32 %v642, 127.0
        %v675 = vmin.f32 %v643, 127.0
        %v676 = vmin.f32 %v644, 127.0
        %v677 = vmin.f32 %v645, 127.0
        %v678 = vmin.f32 %v646, 127.0
        %v679 = vmin.f32 %v647, 127.0
        %v680 = vmin.f32 %v648, 127.0
        %v681 = vmin.f32 %v649, 127.0
        %v682 = vmin.f32 %v650, 127.0
        %v683 = vmin.f32 %v651, 127.0
        %v684 = vmin.f32 %v652, 127.0
        %v685 = vmin.f32 %v653, 127.0
        %v686 = vmin.f32 %v654, 127.0
        %v687 = vmin.f32 %v655, 127.0
        %v688 = vmin.f32 %v656, 127.0
        %v689 = vmin.f32 %v657, 127.0
        %v690 = vmin.f32 %v658, 127.0
        %v691 = vmin.f32 %v659, 127.0
        %v692 = vmin.f32 %v660, 127.0
        %v693 = vmin.f32 %v661, 127.0
        %v694 = vmin.f32 %v662, 127.0
        %v695 = vmin.f32 %v663, 127.0
        %v696 = vmin.f32 %v664, 127.0
        %v697 = vmin.f32 %v665, 127.0
        %v698 = vmin.f32 %v666, 127.0
        %v699 = vmin.f32 %v667, 127.0
        %v700 = vmin.f32 %v668, 127.0
        %v701 = vmin.f32 %v669, 127.0
        %v702 = vmin.f32 %v670, 127.0
        %v703 = vmin.f32 %v671, 127.0
        %v704 = vmin.f32 %v672, 127.0
        %v705 = vmax.f32 %v673, -128.0
        %v706 = vmax.f32 %v674, -128.0
        %v707 = vmax.f32 %v675, -128.0
        %v708 = vmax.f32 %v676, -128.0
        %v709 = vmax.f32 %v677, -128.0
        %v710 = vmax.f32 %v678, -128.0
        %v711 = vmax.f32 %v679, -128.0
        %v712 = vmax.f32 %v680, -128.0
        %v713 = vmax.f32 %v681, -128.0
        %v714 = vmax.f32 %v682, -128.0
        %v715 = vmax.f32 %v683, -128.0
        %v716 = vmax.f32 %v684, -128.0
        %v717 = vmax.f32 %v685, -128.0
        %v718 = vmax.f32 %v686, -128.0
        %v719 = vmax.f32 %v687, -128.0
        %v720 = vmax.f32 %v688, -128.0
        %v721 = vmax.f32 %v689, -128.0
        %v722 = vmax.f32 %v690, -128.0
        %v723 = vmax.f32 %v691, -128.0
        %v724 = vmax.f32 %v692, -128.0
        %v725 = vmax.f32 %v693, -128.0
        %v726 = vmax.f32 %v694, -128.0
        %v727 = vmax.f32 %v695, -128.0
        %v728 = vmax.f32 %v696, -128.0
        %v729 = vmax.f32 %v697, -128.0
        %v730 = vmax.f32 %v698, -128.0
        %v731 = vmax.f32 %v699, -128.0
        %v732 = vmax.f32 %v700, -128.0
        %v733 = vmax.f32 %v701, -128.0
        %v734 = vmax.f32 %v702, -128.0
        %v735 = vmax.f32 %v703, -128.0
        %v736 = vmax.f32 %v704, -128.0
        %v737 = vmin.f32 %v705, 127.0
        %v738 = vmin.f32 %v706, 127.0
        %v739 = vmin.f32 %v707, 127.0
        %v740 = vmin.f32 %v708, 127.0
        %v741 = vmin.f32 %v709, 127.0
        %v742 = vmin.f32 %v710, 127.0
        %v743 = vmin.f32 %v711, 127.0
        %v744 = vmin.f32 %v712, 127.0
        %v745 = vmin.f32 %v713, 127.0
        %v746 = vmin.f32 %v714, 127.0
        %v747 = vmin.f32 %v715, 127.0
        %v748 = vmin.f32 %v716, 127.0
        %v749 = vmin.f32 %v717, 127.0
        %v750 = vmin.f32 %v718, 127.0
        %v751 = vmin.f32 %v719, 127.0
        %v752 = vmin.f32 %v720, 127.0
        %v753 = vmin.f32 %v721, 127.0
        %v754 = vmin.f32 %v722, 127.0
        %v755 = vmin.f32 %v723, 127.0
        %v756 = vmin.f32 %v724, 127.0
        %v757 = vmin.f32 %v725, 127.0
        %v758 = vmin.f32 %v726, 127.0
        %v759 = vmin.f32 %v727, 127.0
        %v760 = vmin.f32 %v728, 127.0
        %v761 = vmin.f32 %v729, 127.0
        %v762 = vmin.f32 %v730, 127.0
        %v763 = vmin.f32 %v731, 127.0
        %v764 = vmin.f32 %v732, 127.0
        %v765 = vmin.f32 %v733, 127.0
        %v766 = vmin.f32 %v734, 127.0
        %v767 = vmin.f32 %v735, 127.0
        %v768 = vmin.f32 %v736, 127.0
        %v769 = vcvt.f32.s32.to.zero.pseudo %v737
        %v770 = vcvt.f32.s32.to.zero.pseudo %v738
        %v771 = vcvt.f32.s32.to.zero.pseudo %v739
        %v772 = vcvt.f32.s32.to.zero.pseudo %v740
        %v773 = vcvt.f32.s32.to.zero.pseudo %v741
        %v774 = vcvt.f32.s32.to.zero.pseudo %v742
        %v775 = vcvt.f32.s32.to.zero.pseudo %v743
        %v776 = vcvt.f32.s32.to.zero.pseudo %v744
        %v777 = vcvt.f32.s32.to.zero.pseudo %v745
        %v778 = vcvt.f32.s32.to.zero.pseudo %v746
        %v779 = vcvt.f32.s32.to.zero.pseudo %v747
        %v780 = vcvt.f32.s32.to.zero.pseudo %v748
        %v781 = vcvt.f32.s32.to.zero.pseudo %v749
        %v782 = vcvt.f32.s32.to.zero.pseudo %v750
        %v783 = vcvt.f32.s32.to.zero.pseudo %v751
        %v784 = vcvt.f32.s32.to.zero.pseudo %v752
        %v785 = vcvt.f32.s32.to.zero.pseudo %v753
        %v786 = vcvt.f32.s32.to.zero.pseudo %v754
        %v787 = vcvt.f32.s32.to.zero.pseudo %v755
        %v788 = vcvt.f32.s32.to.zero.pseudo %v756
        %v789 = vcvt.f32.s32.to.zero.pseudo %v757
        %v790 = vcvt.f32.s32.to.zero.pseudo %v758
        %v791 = vcvt.f32.s32.to.zero.pseudo %v759
        %v792 = vcvt.f32.s32.to.zero.pseudo %v760
        %v793 = vcvt.f32.s32.to.zero.pseudo %v761
        %v794 = vcvt.f32.s32.to.zero.pseudo %v762
        %v795 = vcvt.f32.s32.to.zero.pseudo %v763
        %v796 = vcvt.f32.s32.to.zero.pseudo %v764
        %v797 = vcvt.f32.s32.to.zero.pseudo %v765
        %v798 = vcvt.f32.s32.to.zero.pseudo %v766
        %v799 = vcvt.f32.s32.to.zero.pseudo %v767
        %v800 = vcvt.f32.s32.to.zero.pseudo %v768
        %v801 = vpack.c.b16 %v770, %v769
        %v802 = vpack.c.b16 %v772, %v771
        %v803 = vpack.c.b8 %v802, %v801
        %v804 = vpack.c.b16 %v774, %v773
        %v805 = vpack.c.b16 %v776, %v775
        %v806 = vpack.c.b8 %v805, %v804
        %v807 = vpack.c.b16 %v778, %v777
        %v808 = vpack.c.b16 %v780, %v779
        %v809 = vpack.c.b8 %v808, %v807
        %v810 = vpack.c.b16 %v782, %v781
        %v811 = vpack.c.b16 %v784, %v783
        %v812 = vpack.c.b8 %v811, %v810
        %v813 = vpack.c.b16 %v786, %v785
        %v814 = vpack.c.b16 %v788, %v787
        %v815 = vpack.c.b8 %v814, %v813
        %v816 = vpack.c.b16 %v790, %v789
        %v817 = vpack.c.b16 %v792, %v791
        %v818 = vpack.c.b8 %v817, %v816
        %v819 = vpack.c.b16 %v794, %v793
        %v820 = vpack.c.b16 %v796, %v795
        %v821 = vpack.c.b8 %v820, %v819
        %v822 = vpack.c.b16 %v798, %v797
        %v823 = vpack.c.b16 %v800, %v799
        %v824 = vpack.c.b8 %v823, %v822
        %825 = vst [vmem:[%s253] sm:$0xff] %v803
        %826 = vst [vmem:[%s253 + $0x8] sm:$0xff] %v806
        %827 = vst [vmem:[%s253 + $0x10] sm:$0xff] %v809
        %828 = vst [vmem:[%s253 + $0x18] sm:$0xff] %v812
        %829 = vst [vmem:[%s253 + $0x20] sm:$0xff] %v815
        %830 = vst [vmem:[%s253 + $0x28] sm:$0xff] %v818
        %831 = vst [vmem:[%s253 + $0x30] sm:$0xff] %v821
        %832 = vst [vmem:[%s253 + $0x38] sm:$0xff] %v824
        %s833 = sand.u32 %s132, 1
        %s834 = scalar_lea.sflag [#allocation4], %s833
        %s835 = sand.u32 %s132, 1
        %s836 = smul.addr %s835, 64
        %s837 = scalar_lea.vmem [#allocation7], %s836
        // Predicated region
        $region41: #{tpu_custom_call.1} parent=31 // pred_check
          %p838 = pneg %p142
        $region42: #{tpu_custom_call.1} parent=31 // pred_check_branch
          %840 = sbr.rel (%p838) target = $region44
        $region43: #{tpu_custom_call.1} parent=31 // pred_region
          %s841 = smul.u32 8, %s26
          %843 = vsyncadd %s834, 0
          %s844 = sadd.s32 %s27, %s841
          %s845 = smul.addr %s844, 8
          %s846 = scalar_lea.hbm %s3, %s845
          %s847 = sshll.u32 %s837, 4
          %s848 = int_to_ptr.vmem [resolvable:$true] %s847
          %s849 = sshll.u32 %s846, 4
          %s850 = int_to_ptr.hbm [resolvable:$true] %s849
          %855 = dma.vmem_to_hbm [thread:$0]  %s848, 1024, %s850, %s834, 128, 128, 8
        $region44: #{tpu_custom_call.1} parent=31 // pred_fallthru
          _
      $region32: #{tpu_custom_call.1} parent=5 // pred_fallthru
        _
      %p856 = scmp.le.s32.totalorder 2, %s16
      // Predicated region
      $region45: #{tpu_custom_call.1} parent=5 // pred_check
        %p857 = pneg %p856
      $region46: #{tpu_custom_call.1} parent=5 // pred_check_branch
        %859 = sbr.rel (%p857) target = $region48
      $region47: #{tpu_custom_call.1} parent=5 // pred_region
        %s860 = ssub.s32 %s16, 2
        // Predicated region
        $region49: #{tpu_custom_call.1} parent=47 // pred_check
          %p861 = pneg %p148
        $region50: #{tpu_custom_call.1} parent=47 // pred_check_branch
          %863 = sbr.rel (%p861) target = $region52
        $region51: #{tpu_custom_call.1} parent=47 // pred_region
          %s864 = sand.u32 %s133, 1
          %s865 = scalar_lea.sflag [#allocation4], %s864
          %s866 = sand.u32 %s133, 1
          %s867 = smul.addr %s866, 64
          %s868 = scalar_lea.vmem [#allocation7], %s867
          %870 = dma.done %s865, 1024
        $region52: #{tpu_custom_call.1} parent=47 // pred_fallthru
          _
      $region48: #{tpu_custom_call.1} parent=5 // pred_fallthru
        _
    $region6: #{tpu_custom_call.1} parent=1 // loop_footer
      %s20 = sadd.s32 1, %s16
    $region7: #{tpu_custom_call.1} parent=1 // loop_footer_branch
      %15 = sbr.rel target = $region3
    $region8: #{tpu_custom_call.1} parent=1 // loop_exit
      _
    %871 = vsyncpa [#allocation3], 1
    %s872 = scalar_lea.sflag [#allocation3], 1
    %873 = vsyncpa %s872, 1
    %874 = vsyncpa [#allocation6], 1
    %875 = vsyncpa [#allocation4], 1
    %s876 = scalar_lea.sflag [#allocation4], 1
    %877 = vsyncpa %s876, 1

</llo_original>
